<compile_context>
chip_gen: v7x
topology: tpu7x:2x2x1
jax: 0.10.0
libtpu: 0.0.40
codegen_flags: <defaults>
</compile_context>

<pallas_src>
import numpy as np
import jax
import jax.numpy as jnp
from jax.experimental import pallas as pl
from jax.experimental.pallas import tpu as pltpu

LANE = 128  # pad every layer width (and the output slab) to the 128-lane width


def _round_up(x, m):
    return (x + m - 1) // m * m


def _default_tanh_dtype():
    """bf16 tanh on v6e/v7x (bf16 EUP/VPU); f32 on v5e and older."""
    try:
        kind = jax.devices()[0].device_kind.lower()
    except Exception:
        return jnp.float32
    if any(tag in kind for tag in ("v2", "v3", "v4", "v5")):
        return jnp.float32
    return jnp.bfloat16


# ----------------------------------------------------------------------------
# Kernel: full MLP forward on one batch tile.  Weights/biases are packed and
# zero-padded to (L, LANE, LANE) / (L, LANE); padded rows/cols/lanes contribute
# exactly zero (tanh(0) = 0), so the math matches the unpadded network.
# ----------------------------------------------------------------------------
def make_mlp_actor_kernel(n_layers, k_pad, tanh_dtype):
    def kernel(x_ref, w_ref, b_ref, o_ref):
        h = x_ref[...].astype(jnp.bfloat16)  # (block_m, k_pad) bf16 MXU input
        for l in range(n_layers):  # static unroll over the thin layer stack
            # Layer 0: slice the ref (aligned bf16 sublane subtile), not the value.
            w = w_ref[l] if (l > 0 or k_pad == LANE) else w_ref[l, :k_pad, :]
            acc = jnp.dot(h, w, preferred_element_type=jnp.float32)
            acc = acc + b_ref[l : l + 1, :]  # f32 bias, broadcast over rows
            if l < n_layers - 1:
                # tanh in bf16 on v6e/v7x (halves EUP pushes), f32 on v5e;
                # carry the activation in bf16 straight into the next MXU dot.
                h = jnp.tanh(acc.astype(tanh_dtype)).astype(jnp.bfloat16)
            else:
                h = acc  # final layer: no activation, keep f32 accumulator
        o_ref[...] = h.astype(o_ref.dtype)  # (block_m, LANE) lane-dense store

    return kernel


# ----------------------------------------------------------------------------
# Wrapper: batch tiling (partial last block, no whole-array pad), packed
# resident params, lane-dense padded output.
# ----------------------------------------------------------------------------
def mlp_actor_forward(
    obs, wpack, bpack, layer_dims, block_m=None, tanh_dtype=None, out_dtype=jnp.float32
):
    """obs: (B, obs_dim) f32.  wpack: (L, LANE, LANE) bf16.  bpack: (L, LANE) f32."""
    B, obs_dim = obs.shape
    assert obs_dim == layer_dims[0] and obs_dim <= LANE
    act_dim = layer_dims[-1]
    n_layers = len(layer_dims) - 1

    if tanh_dtype is None:
        tanh_dtype = _default_tanh_dtype()

    # Pad the feature (K) dim only to a multiple of 16 (bf16 sublane alignment for
    # the layer-0 weight ref-slice), not to 128 -- keeps input HBM traffic small.
    k_pad = _round_up(obs_dim, 16)
    if k_pad != obs_dim:
        obs = jnp.pad(obs, ((0, 0), (0, k_pad - obs_dim)))

    # Batch tile: single tile up to 1024 rows (dispatch-dominated regime anyway);
    # for larger B use >=2 tiles (v7x 2-TC sharding) of at most 2048 rows
    # (~85% of HBM roofline per measured tiling data, comfortably within VMEM).
    if block_m is None:
        if B <= 1024:
            block_m = max(8, _round_up(B, 8))
        else:
            block_m = min(2048, _round_up(-(-B // 2), 8))
    grid_m = (B + block_m - 1) // block_m  # partial last block is fine (rows indep.)

    out_bytes = jnp.dtype(out_dtype).itemsize
    flops = 2 * B * sum(layer_dims[i] * layer_dims[i + 1] for i in range(n_layers))
    transcendentals = B * LANE * (n_layers - 1)  # kernel evaluates tanh on padded lanes
    bytes_accessed = (
        B * k_pad * 4 + wpack.size * 2 + bpack.size * 4 + B * LANE * out_bytes
    )

    kernel = make_mlp_actor_kernel(n_layers, k_pad, tanh_dtype)

    out = pl.pallas_call(
        kernel,
        out_shape=jax.ShapeDtypeStruct((B, LANE), out_dtype),
        grid=(grid_m,),
        in_specs=[
            pl.BlockSpec((block_m, k_pad), lambda i: (i, 0)),  # pipelined obs tile
            pl.BlockSpec((n_layers, LANE, LANE), lambda i: (0, 0, 0)),  # resident W
            pl.BlockSpec((n_layers, LANE), lambda i: (0, 0)),  # resident b
        ],
        out_specs=pl.BlockSpec((block_m, LANE), lambda i: (i, 0)),
        compiler_params=pltpu.CompilerParams(dimension_semantics=("parallel",)),
        cost_estimate=pl.CostEstimate(
            flops=flops,
            transcendentals=transcendentals,
            bytes_accessed=bytes_accessed,
        ),
    )(obs, wpack, bpack)
    return out[:, :act_dim]


# ----------------------------------------------------------------------------
# Deterministic parameter init mirroring nn.init.orthogonal_ + zero bias.
# ----------------------------------------------------------------------------
def orthogonal_init(key, out_features, in_features, gain):
    rows, cols = out_features, in_features
    a = jax.random.normal(key, (rows, cols), dtype=jnp.float32)
    if rows < cols:
        a = a.T
    q, r = jnp.linalg.qr(a)
    d = jnp.sign(jnp.diag(r))
    q = q * d[None, :]
    if rows < cols:
        q = q.T
    return (gain * q).astype(jnp.float32)  # (out, in)


def pack_params(raw_params, lane=LANE):
    """raw_params: list of (W_T (in,out) f32, b (out,) f32) -> packed bf16 W, f32 b."""
    n = len(raw_params)
    wpack = np.zeros((n, lane, lane), dtype=np.float32)
    bpack = np.zeros((n, lane), dtype=np.float32)
    for l, (w, b) in enumerate(raw_params):
        i, o = w.shape
        assert i <= lane and o <= lane, "layer width must be <= 128 for this packing"
        wpack[l, :i, :o] = np.asarray(w)
        bpack[l, :o] = np.asarray(b)
    return jnp.asarray(wpack).astype(jnp.bfloat16), jnp.asarray(bpack)


def make_mlp_actor_params(key, obs_dim, hidden_sizes, act_dim):
    sizes = [obs_dim] + list(hidden_sizes) + [act_dim]
    gains = [float(np.sqrt(2.0))] * len(hidden_sizes) + [0.01]
    raw = []
    for i in range(len(sizes) - 1):
        key, sub = jax.random.split(key)
        w = orthogonal_init(sub, sizes[i + 1], sizes[i], gains[i])  # (out, in)
        b = jnp.zeros((sizes[i + 1],), dtype=jnp.float32)
        raw.append((w.T, b))  # store transposed (in, out): y = x @ W.T + b
    wpack, bpack = pack_params(raw)
    return raw, wpack, bpack, sizes


# ----------------------------------------------------------------------------
# Pure-JAX reference mirroring the kernel's dtype path
# (bf16 weights/activations, f32 accumulate, tanh in `tanh_dtype`).
# ----------------------------------------------------------------------------
def reference_forward(obs, raw_params, tanh_dtype):
    h = obs.astype(jnp.bfloat16)
    n = len(raw_params)
    for l, (w, b) in enumerate(raw_params):
        acc = (
            jnp.dot(h, w.astype(jnp.bfloat16), preferred_element_type=jnp.float32) + b
        )
        if l < n - 1:
            h = jnp.tanh(acc.astype(tanh_dtype)).astype(jnp.bfloat16)
        else:
            h = acc
    return h


if __name__ == "__main__":
    obs_dim, act_dim = 16, 4
    hidden_sizes = [32, 32]
    batch = 8

    key = jax.random.PRNGKey(0)
    key, k_obs = jax.random.split(key)
    obs = jax.random.normal(k_obs, (batch, obs_dim), dtype=jnp.float32)

    raw_params, wpack, bpack, layer_dims = make_mlp_actor_params(
        key, obs_dim, hidden_sizes, act_dim
    )

    tanh_dtype = _default_tanh_dtype()
    out = mlp_actor_forward(obs, wpack, bpack, layer_dims, tanh_dtype=tanh_dtype)
    out = jax.block_until_ready(out)
    assert out.shape == (batch, act_dim)

    ref = reference_forward(obs, raw_params, tanh_dtype)
    if tanh_dtype == jnp.float32:
        rtol, atol = 1e-3, 1e-3
    else:
        rtol, atol = 2e-2, 2e-3  # allow 1-ulp bf16 tanh impl differences (EUP vs XLA)
    np.testing.assert_allclose(np.asarray(out), np.asarray(ref), rtol=rtol, atol=atol)

    # TODO(synk): downstream Categorical/Normal distribution methods (sampling,
    # log_prob, KL, entropy) are abstract in MLPActor and not part of the net
    # forward pass, so they are not implemented here.
    print("KERNEL_OK")
</pallas_src>

<mosaic_0001>
module attributes {stable_mosaic.version = 11 : i64} {
  func.func @kernel(%arg0: i32, %arg1: memref<8x16xf32, #tpu.memory_space<vmem>>, %arg2: memref<3x128x128xbf16, #tpu.memory_space<vmem>>, %arg3: memref<3x128xf32, #tpu.memory_space<vmem>>, %arg4: memref<8x128xf32, #tpu.memory_space<vmem>>) attributes {dimension_semantics = [#tpu.dimension_semantics<parallel>], iteration_bounds = array<i64: 1>, scalar_prefetch = 0 : i64, scratch_operands = 0 : i64, tpu.core_type = #tpu.core_type<tc>, window_params = [{transform_indices = @transform_0, window_bounds = array<i64: 8, 16>}, {pipeline_mode = #tpu.pipeline_mode<synchronous>, transform_indices = @transform_1, window_bounds = array<i64: 3, 128, 128>}, {pipeline_mode = #tpu.pipeline_mode<synchronous>, transform_indices = @transform_2, window_bounds = array<i64: 3, 128>}, {transform_indices = @transform_3, window_bounds = array<i64: 8, 128>}]} {
    %c0 = arith.constant 0 : index
    %c0_0 = arith.constant 0 : index
    %0 = vector.load %arg1[%c0, %c0_0] : memref<8x16xf32, #tpu.memory_space<vmem>>, vector<8x16xf32>
    %1 = arith.truncf %0 : vector<8x16xf32> to vector<8x16xbf16>
    %c0_1 = arith.constant 0 : index
    %c0_2 = arith.constant 0 : index
    %c0_3 = arith.constant 0 : index
    %2 = vector.load %arg2[%c0_1, %c0_2, %c0_3] : memref<3x128x128xbf16, #tpu.memory_space<vmem>>, vector<1x16x128xbf16>
    %3 = vector.shape_cast %2 : vector<1x16x128xbf16> to vector<16x128xbf16>
    %cst = arith.constant dense<0.000000e+00> : vector<8x128xf32>
    %4 = tpu.matmul %1, %3, %cst {dimension_numbers = #tpu.dot_dimension_numbers<[1], [0], [0], [1], [0, 0, 1, 1], [], []>} : vector<8x16xbf16>, vector<16x128xbf16>, vector<8x128xf32> -> vector<8x128xf32>
    %c0_4 = arith.constant 0 : index
    %c0_5 = arith.constant 0 : index
    %5 = vector.load %arg3[%c0_4, %c0_5] : memref<3x128xf32, #tpu.memory_space<vmem>>, vector<1x128xf32>
    %6 = vector.broadcast %5 : vector<1x128xf32> to vector<8x128xf32>
    %7 = arith.addf %4, %6 : vector<8x128xf32>
    %8 = arith.truncf %7 : vector<8x128xf32> to vector<8x128xbf16>
    %9 = math.tanh %8 : vector<8x128xbf16>
    %c1 = arith.constant 1 : index
    %c0_6 = arith.constant 0 : index
    %c0_7 = arith.constant 0 : index
    %10 = vector.load %arg2[%c1, %c0_6, %c0_7] : memref<3x128x128xbf16, #tpu.memory_space<vmem>>, vector<1x128x128xbf16>
    %11 = vector.shape_cast %10 : vector<1x128x128xbf16> to vector<128x128xbf16>
    %cst_8 = arith.constant dense<0.000000e+00> : vector<8x128xf32>
    %12 = tpu.matmul %9, %11, %cst_8 {dimension_numbers = #tpu.dot_dimension_numbers<[1], [0], [0], [1], [0, 0, 1, 1], [], []>} : vector<8x128xbf16>, vector<128x128xbf16>, vector<8x128xf32> -> vector<8x128xf32>
    %c1_9 = arith.constant 1 : index
    %c0_10 = arith.constant 0 : index
    %13 = vector.load %arg3[%c1_9, %c0_10] : memref<3x128xf32, #tpu.memory_space<vmem>>, vector<1x128xf32>
    %14 = vector.broadcast %13 : vector<1x128xf32> to vector<8x128xf32>
    %15 = arith.addf %12, %14 : vector<8x128xf32>
    %16 = arith.truncf %15 : vector<8x128xf32> to vector<8x128xbf16>
    %17 = math.tanh %16 : vector<8x128xbf16>
    %c2 = arith.constant 2 : index
    %c0_11 = arith.constant 0 : index
    %c0_12 = arith.constant 0 : index
    %18 = vector.load %arg2[%c2, %c0_11, %c0_12] : memref<3x128x128xbf16, #tpu.memory_space<vmem>>, vector<1x128x128xbf16>
    %19 = vector.shape_cast %18 : vector<1x128x128xbf16> to vector<128x128xbf16>
    %cst_13 = arith.constant dense<0.000000e+00> : vector<8x128xf32>
    %20 = tpu.matmul %17, %19, %cst_13 {dimension_numbers = #tpu.dot_dimension_numbers<[1], [0], [0], [1], [0, 0, 1, 1], [], []>} : vector<8x128xbf16>, vector<128x128xbf16>, vector<8x128xf32> -> vector<8x128xf32>
    %c2_14 = arith.constant 2 : index
    %c0_15 = arith.constant 0 : index
    %21 = vector.load %arg3[%c2_14, %c0_15] : memref<3x128xf32, #tpu.memory_space<vmem>>, vector<1x128xf32>
    %22 = vector.broadcast %21 : vector<1x128xf32> to vector<8x128xf32>
    %23 = arith.addf %20, %22 : vector<8x128xf32>
    %c0_16 = arith.constant 0 : index
    %c0_17 = arith.constant 0 : index
    %24 = vector.load %arg4[%c0_16, %c0_17] : memref<8x128xf32, #tpu.memory_space<vmem>>, vector<8x128xf32>
    tpu.vector_store %arg4[%c0_16, %c0_17], %23 {strides = array<i32>} : memref<8x128xf32, #tpu.memory_space<vmem>>, vector<8x128xf32>,
    return
  }
  func.func @transform_0(%arg0: i32) -> (i32, i32) {
    %c0_i32 = arith.constant 0 : i32
    %c0_i32_0 = arith.constant 0 : i32
    return %arg0, %c0_i32 : i32, i32
  }
  func.func @transform_1(%arg0: i32) -> (i32, i32, i32) {
    %c0_i32 = arith.constant 0 : i32
    %c0_i32_0 = arith.constant 0 : i32
    %c0_i32_1 = arith.constant 0 : i32
    %c0_i32_2 = arith.constant 0 : i32
    return %c0_i32, %c0_i32_0, %c0_i32_1 : i32, i32, i32
  }
  func.func @transform_2(%arg0: i32) -> (i32, i32) {
    %c0_i32 = arith.constant 0 : i32
    %c0_i32_0 = arith.constant 0 : i32
    %c0_i32_1 = arith.constant 0 : i32
    return %c0_i32, %c0_i32_0 : i32, i32
  }
  func.func @transform_3(%arg0: i32) -> (i32, i32) {
    %c0_i32 = arith.constant 0 : i32
    %c0_i32_0 = arith.constant 0 : i32
    return %arg0, %c0_i32 : i32, i32
  }
}

</mosaic_0001>

<llo_original>
// kernel: tpu_custom_call.1
$region0: #{tpu_custom_call.1}
  #allocation0 [shape = 'u32[]', space=smem, size = 0x4, offset = 0x4, fixed_abs, tag = 'smem constant byte address 0x4 - core index']
  #allocation1 [shape = 'u32[144,128]{1,0:T(1,128)}', space=vmem, size = 0x12000, scoped, tag = 'internal scratch']
  %s0 = inlined_call_operand.hbm [shape: f32[8,16], index: 0, kind: input, shape index: {}]
  %s1 = inlined_call_operand.hbm [shape: bf16[3,128,128], index: 1, kind: input, shape index: {}]
  %s2 = inlined_call_operand.vmem [shape: f32[3,128], index: 2, kind: input, shape index: {}]
  %s3 = inlined_call_operand.hbm [shape: f32[8,128], index: 3, kind: output, shape index: {}]
  %s4 = sld [smem:[#allocation0]]
  $region30: #{tpu_custom_call.1} parent=0
    _
  %s6 = ssub.s32 1, %s4
  %s7 = scalar_select 0, %s6, %s4
  $region1: #{tpu_custom_call.1} parent=0
    #allocation2 [shape = 'u8[4096]{0}', space=vmem, size = 0x1000, scoped, tag = 'input window, operand 0, single buffered']
    #allocation3 [shape = 's32[1]{0}', space=sflag, size = 0x4, scoped, tag = 'scoped memory for tpu_custom_call.1']
    #allocation4 [shape = 's32[1]{0}', space=sflag, size = 0x4, scoped, tag = 'scoped memory for tpu_custom_call.1']
    #allocation5 [shape = 'u8[98304]{0}', space=vmem, size = 0x18000, scoped, tag = 'input window, operand 1, single buffered']
    #allocation6 [shape = 's32[1]{0}', space=sflag, size = 0x4, scoped, tag = 'scoped memory for tpu_custom_call.1']
    #allocation7 [shape = 'u8[4096]{0}', space=vmem, size = 0x1000, scoped, tag = 'output window, operand 0, single buffered']
    %8 = vsyncpa [#allocation3], 0
    %9 = vsyncpa [#allocation6], 0
    %10 = vsyncpa [#allocation4], 0
    // Predicated region
    $region2: #{tpu_custom_call.1} parent=1 // pred_check
      _
    $region3: #{tpu_custom_call.1} parent=1 // pred_check_branch
      %12 = sbr.rel (0) target = $region5
    $region4: #{tpu_custom_call.1} parent=1 // pred_region
      %s14 = ssub.s32 128, 128
      %15 = vsyncadd [#allocation3], %s14
      %s17 = sshll.u32 [#allocation2], 4
      %s18 = int_to_ptr.vmem [resolvable:$true] %s17
      %20 = dma.hbm_to_vmem [thread:$0]  %s0, 128, %s18, [#allocation3]
    $region5: #{tpu_custom_call.1} parent=1 // pred_fallthru
      _
    // Predicated region
    $region6: #{tpu_custom_call.1} parent=1 // pred_check
      _
    $region7: #{tpu_custom_call.1} parent=1 // pred_check_branch
      %22 = sbr.rel (0) target = $region9
    $region8: #{tpu_custom_call.1} parent=1 // pred_region
      %s24 = ssub.s32 3072, 3072
      %25 = vsyncadd [#allocation6], %s24
      %s26 = sshll.u32 [#allocation5], 4
      %s27 = int_to_ptr.vmem [resolvable:$true] %s26
      %32 = dma.hbm_to_vmem [thread:$0]  %s1, 3072, %s27, [#allocation6], 64, 64, 4
    $region9: #{tpu_custom_call.1} parent=1 // pred_fallthru
      _
    // Predicated region
    $region10: #{tpu_custom_call.1} parent=1 // pred_check
      _
    $region11: #{tpu_custom_call.1} parent=1 // pred_check_branch
      %34 = sbr.rel (0) target = $region13
    $region12: #{tpu_custom_call.1} parent=1 // pred_region
      _
    $region13: #{tpu_custom_call.1} parent=1 // pred_fallthru
      _
    // Predicated region
    $region14: #{tpu_custom_call.1} parent=1 // pred_check
      _
    $region15: #{tpu_custom_call.1} parent=1 // pred_check_branch
      %36 = sbr.rel (0) target = $region17
    $region16: #{tpu_custom_call.1} parent=1 // pred_region
      %37 = dma.done [#allocation3], 128
    $region17: #{tpu_custom_call.1} parent=1 // pred_fallthru
      _
    // Predicated region
    $region18: #{tpu_custom_call.1} parent=1 // pred_check
      _
    $region19: #{tpu_custom_call.1} parent=1 // pred_check_branch
      %39 = sbr.rel (0) target = $region21
    $region20: #{tpu_custom_call.1} parent=1 // pred_region
      %40 = dma.done [#allocation6], 3072
    $region21: #{tpu_custom_call.1} parent=1 // pred_fallthru
      _
    %v42 = vld [vmem:[#allocation2] sm:$0xff]
    %v43 = vpack.c.bf16 %v42, %v42
    %v44 = vld [vmem:[#allocation5] sm:$0xf]
    %v45 = vld [vmem:[#allocation5 + $0x4] sm:$0xf]
    %v46 = vld [vmem:[%s2] sm:$0x1]
    %v47 = vlaneseq
    %v48 = vshrl.u32 %v47, 7
    %v49 = vsub.s32 0, %v48
    %v50 = vrot.slane %v46, %v49
    %v53 = vunpack.c.l.b16 %v44
    %v54 = vunpack.c.l.b16 %v45
    %v55 = vpack.c.b16 %v54, %v53
    %vm57 = vcmask 130048
    %v59 = vsel %vm57, %v43, 0
    %61 = vmatprep.subr.bf16.mxu0 0
    %62 = vmatpush1.bf16.msra.mxu0 %v55
    %63 = vmatprep.subr.bf16.mxu0 0
    %64 = vmatpush1.bf16.msra.mxu0 0
    %65 = vmatprep.subr.bf16.mxu0 0
    %66 = vmatpush1.bf16.msra.mxu0 0
    %67 = vmatprep.subr.bf16.mxu0 0
    %68 = vmatpush1.bf16.msra.mxu0 0
    %69 = vmatprep.subr.bf16.mxu0 0
    %70 = vmatpush1.bf16.msra.mxu0 0
    %71 = vmatprep.subr.bf16.mxu0 0
    %72 = vmatpush1.bf16.msra.mxu0 0
    %73 = vmatprep.subr.bf16.mxu0 0
    %74 = vmatpush1.bf16.msra.mxu0 0
    %75 = vmatprep.subr.bf16.mxu0 0
    %76 = vmatpush1.bf16.msra.mxu0 0
    %77 = vmatprep.subr.bf16.mxu0 0
    %78 = vmatpush1.bf16.msra.mxu0 0
    %79 = vmatprep.subr.bf16.mxu0 0
    %80 = vmatpush1.bf16.msra.mxu0 0
    %81 = vmatprep.subr.bf16.mxu0 0
    %82 = vmatpush1.bf16.msra.mxu0 0
    %83 = vmatprep.subr.bf16.mxu0 0
    %84 = vmatpush1.bf16.msra.mxu0 0
    %85 = vmatprep.subr.bf16.mxu0 0
    %86 = vmatpush1.bf16.msra.mxu0 0
    %87 = vmatprep.subr.bf16.mxu0 0
    %88 = vmatpush1.bf16.msra.mxu0 0
    %89 = vmatprep.subr.bf16.mxu0 0
    %90 = vmatpush1.bf16.msra.mxu0 0
    %91 = vmatprep.subr.bf16.mxu0 0
    %92 = vmatpush1.bf16.msra.mxu0 0
    %93 = vmatprep.mubr.bf16.mxu0 0
    %94 = vmatmul.mubr.bf16.gmra.mrb[0].mxu0 %v59
    %v95 = vpop.f32.mrb[0].mxu0
    %v96 = vadd.f32 %v50, %v95
    %v97 = vpop.f32.mrb[0].mxu0
    %v98 = vpop.f32.mrb[0].mxu0
    %v99 = vpop.f32.mrb[0].mxu0
    %100 = vdwg.mxu0
    %v101 = vpack.c.bf16 %v96, %v96
    %v102 = vtanh.bf16.pop %v101
    %s103 = scalar_lea.vmem [#allocation5], 64
    %v104 = vld [vmem:[%s103] sm:$0xf]
    %v105 = vld [vmem:[%s103 + $0x4] sm:$0xf]
    %v106 = vld [vmem:[%s103 + $0x8] sm:$0xf]
    %v107 = vld [vmem:[%s103 + $0xc] sm:$0xf]
    %v108 = vld [vmem:[%s103 + $0x10] sm:$0xf]
    %v109 = vld [vmem:[%s103 + $0x14] sm:$0xf]
    %v110 = vld [vmem:[%s103 + $0x18] sm:$0xf]
    %v111 = vld [vmem:[%s103 + $0x1c] sm:$0xf]
    %v112 = vld [vmem:[%s103 + $0x20] sm:$0xf]
    %v113 = vld [vmem:[%s103 + $0x24] sm:$0xf]
    %v114 = vld [vmem:[%s103 + $0x28] sm:$0xf]
    %v115 = vld [vmem:[%s103 + $0x2c] sm:$0xf]
    %v116 = vld [vmem:[%s103 + $0x30] sm:$0xf]
    %v117 = vld [vmem:[%s103 + $0x34] sm:$0xf]
    %v118 = vld [vmem:[%s103 + $0x38] sm:$0xf]
    %v119 = vld [vmem:[%s103 + $0x3c] sm:$0xf]
    %v120 = vld [vmem:[%s2 + $0x1] sm:$0x1]
    %v121 = vlaneseq
    %v122 = vshrl.u32 %v121, 7
    %v123 = vsub.s32 0, %v122
    %v124 = vrot.slane %v120, %v123
    %v141 = vunpack.c.l.b16 %v104
    %v142 = vunpack.c.l.b16 %v105
    %v143 = vunpack.c.l.b16 %v106
    %v144 = vunpack.c.l.b16 %v107
    %v145 = vunpack.c.l.b16 %v108
    %v146 = vunpack.c.l.b16 %v109
    %v147 = vunpack.c.l.b16 %v110
    %v148 = vunpack.c.l.b16 %v111
    %v149 = vunpack.c.l.b16 %v112
    %v150 = vunpack.c.l.b16 %v113
    %v151 = vunpack.c.l.b16 %v114
    %v152 = vunpack.c.l.b16 %v115
    %v153 = vunpack.c.l.b16 %v116
    %v154 = vunpack.c.l.b16 %v117
    %v155 = vunpack.c.l.b16 %v118
    %v156 = vunpack.c.l.b16 %v119
    %v157 = vpack.c.b16 %v142, %v141
    %v158 = vpack.c.b16 %v144, %v143
    %v159 = vpack.c.b16 %v146, %v145
    %v160 = vpack.c.b16 %v148, %v147
    %v161 = vpack.c.b16 %v150, %v149
    %v162 = vpack.c.b16 %v152, %v151
    %v163 = vpack.c.b16 %v154, %v153
    %v164 = vpack.c.b16 %v156, %v155
    %173 = vmatprep.subr.bf16.mxu0 0
    %174 = vmatpush1.bf16.msra.mxu0 %v157
    %175 = vmatprep.subr.bf16.mxu0 0
    %176 = vmatpush1.bf16.msra.mxu0 %v158
    %177 = vmatprep.subr.bf16.mxu0 0
    %178 = vmatpush1.bf16.msra.mxu0 %v159
    %179 = vmatprep.subr.bf16.mxu0 0
    %180 = vmatpush1.bf16.msra.mxu0 %v160
    %181 = vmatprep.subr.bf16.mxu0 0
    %182 = vmatpush1.bf16.msra.mxu0 %v161
    %183 = vmatprep.subr.bf16.mxu0 0
    %184 = vmatpush1.bf16.msra.mxu0 %v162
    %185 = vmatprep.subr.bf16.mxu0 0
    %186 = vmatpush1.bf16.msra.mxu0 %v163
    %187 = vmatprep.subr.bf16.mxu0 0
    %188 = vmatpush1.bf16.msra.mxu0 %v164
    %189 = vmatprep.subr.bf16.mxu0 0
    %190 = vmatpush1.bf16.msra.mxu0 0
    %191 = vmatprep.subr.bf16.mxu0 0
    %192 = vmatpush1.bf16.msra.mxu0 0
    %193 = vmatprep.subr.bf16.mxu0 0
    %194 = vmatpush1.bf16.msra.mxu0 0
    %195 = vmatprep.subr.bf16.mxu0 0
    %196 = vmatpush1.bf16.msra.mxu0 0
    %197 = vmatprep.subr.bf16.mxu0 0
    %198 = vmatpush1.bf16.msra.mxu0 0
    %199 = vmatprep.subr.bf16.mxu0 0
    %200 = vmatpush1.bf16.msra.mxu0 0
    %201 = vmatprep.subr.bf16.mxu0 0
    %202 = vmatpush1.bf16.msra.mxu0 0
    %203 = vmatprep.subr.bf16.mxu0 0
    %204 = vmatpush1.bf16.msra.mxu0 0
    %205 = vmatprep.mubr.bf16.mxu0 0
    %206 = vmatmul.mubr.bf16.gmra.mrb[0].mxu0 %v102
    %v207 = vpop.f32.mrb[0].mxu0
    %v208 = vadd.f32 %v124, %v207
    %v209 = vpop.f32.mrb[0].mxu0
    %v210 = vpop.f32.mrb[0].mxu0
    %v211 = vpop.f32.mrb[0].mxu0
    %212 = vdwg.mxu0
    %v213 = vpack.c.bf16 %v208, %v208
    %v214 = vtanh.bf16.pop %v213
    %s215 = scalar_lea.vmem [#allocation5], 128
    %v216 = vld [vmem:[%s215] sm:$0xf]
    %v217 = vld [vmem:[%s215 + $0x4] sm:$0xf]
    %v218 = vld [vmem:[%s215 + $0x8] sm:$0xf]
    %v219 = vld [vmem:[%s215 + $0xc] sm:$0xf]
    %v220 = vld [vmem:[%s215 + $0x10] sm:$0xf]
    %v221 = vld [vmem:[%s215 + $0x14] sm:$0xf]
    %v222 = vld [vmem:[%s215 + $0x18] sm:$0xf]
    %v223 = vld [vmem:[%s215 + $0x1c] sm:$0xf]
    %v224 = vld [vmem:[%s215 + $0x20] sm:$0xf]
    %v225 = vld [vmem:[%s215 + $0x24] sm:$0xf]
    %v226 = vld [vmem:[%s215 + $0x28] sm:$0xf]
    %v227 = vld [vmem:[%s215 + $0x2c] sm:$0xf]
    %v228 = vld [vmem:[%s215 + $0x30] sm:$0xf]
    %v229 = vld [vmem:[%s215 + $0x34] sm:$0xf]
    %v230 = vld [vmem:[%s215 + $0x38] sm:$0xf]
    %v231 = vld [vmem:[%s215 + $0x3c] sm:$0xf]
    %v232 = vld [vmem:[%s2 + $0x2] sm:$0x1]
    %v233 = vlaneseq
    %v234 = vshrl.u32 %v233, 7
    %v235 = vsub.s32 0, %v234
    %v236 = vrot.slane %v232, %v235
    %v253 = vunpack.c.l.b16 %v216
    %v254 = vunpack.c.l.b16 %v217
    %v255 = vunpack.c.l.b16 %v218
    %v256 = vunpack.c.l.b16 %v219
    %v257 = vunpack.c.l.b16 %v220
    %v258 = vunpack.c.l.b16 %v221
    %v259 = vunpack.c.l.b16 %v222
    %v260 = vunpack.c.l.b16 %v223
    %v261 = vunpack.c.l.b16 %v224
    %v262 = vunpack.c.l.b16 %v225
    %v263 = vunpack.c.l.b16 %v226
    %v264 = vunpack.c.l.b16 %v227
    %v265 = vunpack.c.l.b16 %v228
    %v266 = vunpack.c.l.b16 %v229
    %v267 = vunpack.c.l.b16 %v230
    %v268 = vunpack.c.l.b16 %v231
    %v269 = vpack.c.b16 %v254, %v253
    %v270 = vpack.c.b16 %v256, %v255
    %v271 = vpack.c.b16 %v258, %v257
    %v272 = vpack.c.b16 %v260, %v259
    %v273 = vpack.c.b16 %v262, %v261
    %v274 = vpack.c.b16 %v264, %v263
    %v275 = vpack.c.b16 %v266, %v265
    %v276 = vpack.c.b16 %v268, %v267
    %285 = vmatprep.subr.bf16.mxu0 0
    %286 = vmatpush1.bf16.msra.mxu0 %v269
    %287 = vmatprep.subr.bf16.mxu0 0
    %288 = vmatpush1.bf16.msra.mxu0 %v270
    %289 = vmatprep.subr.bf16.mxu0 0
    %290 = vmatpush1.bf16.msra.mxu0 %v271
    %291 = vmatprep.subr.bf16.mxu0 0
    %292 = vmatpush1.bf16.msra.mxu0 %v272
    %293 = vmatprep.subr.bf16.mxu0 0
    %294 = vmatpush1.bf16.msra.mxu0 %v273
    %295 = vmatprep.subr.bf16.mxu0 0
    %296 = vmatpush1.bf16.msra.mxu0 %v274
    %297 = vmatprep.subr.bf16.mxu0 0
    %298 = vmatpush1.bf16.msra.mxu0 %v275
    %299 = vmatprep.subr.bf16.mxu0 0
    %300 = vmatpush1.bf16.msra.mxu0 %v276
    %301 = vmatprep.subr.bf16.mxu0 0
    %302 = vmatpush1.bf16.msra.mxu0 0
    %303 = vmatprep.subr.bf16.mxu0 0
    %304 = vmatpush1.bf16.msra.mxu0 0
    %305 = vmatprep.subr.bf16.mxu0 0
    %306 = vmatpush1.bf16.msra.mxu0 0
    %307 = vmatprep.subr.bf16.mxu0 0
    %308 = vmatpush1.bf16.msra.mxu0 0
    %309 = vmatprep.subr.bf16.mxu0 0
    %310 = vmatpush1.bf16.msra.mxu0 0
    %311 = vmatprep.subr.bf16.mxu0 0
    %312 = vmatpush1.bf16.msra.mxu0 0
    %313 = vmatprep.subr.bf16.mxu0 0
    %314 = vmatpush1.bf16.msra.mxu0 0
    %315 = vmatprep.subr.bf16.mxu0 0
    %316 = vmatpush1.bf16.msra.mxu0 0
    %317 = vmatprep.mubr.bf16.mxu0 0
    %318 = vmatmul.mubr.bf16.gmra.mrb[0].mxu0 %v214
    %v319 = vpop.f32.mrb[0].mxu0
    %v320 = vadd.f32 %v236, %v319
    %v321 = vpop.f32.mrb[0].mxu0
    %v322 = vpop.f32.mrb[0].mxu0
    %v323 = vpop.f32.mrb[0].mxu0
    %324 = vdwg.mxu0
    %325 = vst [vmem:[#allocation7] sm:$0xff] %v320
    // Predicated region
    $region22: #{tpu_custom_call.1} parent=1 // pred_check
      _
    $region23: #{tpu_custom_call.1} parent=1 // pred_check_branch
      %327 = sbr.rel (0) target = $region25
    $region24: #{tpu_custom_call.1} parent=1 // pred_region
      %s329 = ssub.s32 128, 128
      %330 = vsyncadd [#allocation4], %s329
      %s332 = sshll.u32 [#allocation7], 4
      %s333 = int_to_ptr.vmem [resolvable:$true] %s332
      %335 = dma.vmem_to_hbm [thread:$0]  %s333, 128, %s3, [#allocation4]
    $region25: #{tpu_custom_call.1} parent=1 // pred_fallthru
      _
    // Predicated region
    $region26: #{tpu_custom_call.1} parent=1 // pred_check
      _
    $region27: #{tpu_custom_call.1} parent=1 // pred_check_branch
      %337 = sbr.rel (0) target = $region29
    $region28: #{tpu_custom_call.1} parent=1 // pred_region
      %338 = dma.done [#allocation4], 128
    $region29: #{tpu_custom_call.1} parent=1 // pred_fallthru
      _
    %339 = vsyncpa [#allocation3], 1
    %340 = vsyncpa [#allocation6], 1
    %341 = vsyncpa [#allocation4], 1

</llo_original>
